<compile_context>
chip_gen: v5e
topology: v5e:2x2
jax: 0.10.0
libtpu: 0.0.40
codegen_flags: <defaults>
</compile_context>

<pallas_src>
import jax
import jax.numpy as jnp
from jax.experimental import pallas as pl
from jax.experimental.pallas import tpu as pltpu


HIDDEN = 128


def _num_tensorcores():
    """Best-effort TensorCore-per-chip count (2 on v7x, 1 on v5e/v6e)."""
    try:
        info = pltpu.get_tpu_info()
        for attr in ("num_cores", "num_tensorcores", "core_count",
                     "num_cores_per_chip", "cores_per_chip"):
            try:
                v = getattr(info, attr, None)
            except Exception:
                v = None
            if isinstance(v, int) and 1 <= v <= 8:
                return v
    except Exception:
        pass
    try:
        v = getattr(jax.devices()[0], "num_cores", None)
        if isinstance(v, int) and 1 <= v <= 8:
            return v
    except Exception:
        pass
    return 1


def _value_net_kernel(x1_ref, x2_ref, w1a_ref, w1b_ref, b1_ref,
                      w2_ref, b2_ref, w3_ref, b3_ref, o_ref):
    # fc1 + relu:  h1 = x1 @ w1[:d1] + x2 @ w1[d1:] + b1   (no concat needed)
    h1 = jnp.dot(x1_ref[...], w1a_ref[...], preferred_element_type=jnp.float32)
    h1 = h1 + jnp.dot(x2_ref[...], w1b_ref[...],
                      preferred_element_type=jnp.float32)
    h1 = jnp.maximum(h1 + b1_ref[...], 0.0)          # f32 VPU work

    # fc2 + relu
    h2 = jnp.dot(h1.astype(w2_ref.dtype), w2_ref[...],
                 preferred_element_type=jnp.float32)
    h2 = jnp.maximum(h2 + b2_ref[...], 0.0)

    # fc3, computed transposed -> (out_dim, TM) so the store is lane-dense
    # along the batch tile instead of a masked 1-lane store.
    y = jax.lax.dot_general(
        w3_ref[...], h2.astype(w3_ref.dtype),
        dimension_numbers=(((0,), (1,)), ((), ())),
        preferred_element_type=jnp.float32)
    o_ref[...] = y + b3_ref[...]


def value_net_forward(x1, x2, params, *, block_m=1024,
                      compute_dtype=jnp.float32):
    """Fused 3-layer MLP, tiled over the batch dimension.

    x1: (B, input1_dim), x2: (B, input2_dim).
    params: w1 (d1+d2, 128), b1 (1, 128), w2 (128, 128), b2 (1, 128),
            w3 (128, out_dim), b3 (1, out_dim)   (weights transposed vs torch).
    """
    batch, d1 = x1.shape
    d2 = x2.shape[1]
    out_dim = params["w3"].shape[1]

    # ---- batch-tile selection ------------------------------------------
    n_cores = _num_tensorcores()
    if batch <= 128:
        # Single small tile (lane-density / megacore irrelevant at this size).
        tm = max(8, ((batch + 7) // 8) * 8)
    else:
        tm = min(block_m, batch)
        if n_cores > 1:
            # Ensure >= n_cores grid steps so every TensorCore gets work (v7x).
            tm = min(tm, pl.cdiv(batch, n_cores))
        # Multiple of 128 -> lane-dense (out_dim, tm) output blocks.
        tm = ((tm + 127) // 128) * 128
    padded_b = pl.cdiv(batch, tm) * tm
    grid = (padded_b // tm,)

    # ---- operands --------------------------------------------------------
    x1c = x1.astype(compute_dtype)
    x2c = x2.astype(compute_dtype)
    if padded_b != batch:
        x1c = jnp.pad(x1c, ((0, padded_b - batch), (0, 0)))
        x2c = jnp.pad(x2c, ((0, padded_b - batch), (0, 0)))

    w1a = params["w1"][:d1].astype(compute_dtype)
    w1b = params["w1"][d1:].astype(compute_dtype)
    w2 = params["w2"].astype(compute_dtype)
    w3 = params["w3"].astype(compute_dtype)
    b1 = params["b1"].astype(jnp.float32)
    b2 = params["b2"].astype(jnp.float32)
    b3t = params["b3"].astype(jnp.float32).T            # (out_dim, 1)

    # ---- specs ------------------------------------------------------------
    x1_spec = pl.BlockSpec((tm, d1), lambda i: (i, 0))
    x2_spec = pl.BlockSpec((tm, d2), lambda i: (i, 0))
    out_spec = pl.BlockSpec((out_dim, tm), lambda i: (0, i))

    def const_spec(arr):
        return pl.BlockSpec(arr.shape, lambda i: (0, 0))

    itemsize = jnp.dtype(compute_dtype).itemsize
    weight_bytes = (itemsize * (w1a.size + w1b.size + w2.size + w3.size)
                    + 4 * (b1.size + b2.size + b3t.size))
    cost = pl.CostEstimate(
        flops=2 * padded_b * HIDDEN * (d1 + d2 + HIDDEN + out_dim),
        transcendentals=0,
        bytes_accessed=(itemsize * padded_b * (d1 + d2)
                        + 4 * padded_b * out_dim + weight_bytes),
    )

    out_t = pl.pallas_call(
        _value_net_kernel,
        out_shape=jax.ShapeDtypeStruct((out_dim, padded_b), jnp.float32),
        grid=grid,
        in_specs=[
            x1_spec,
            x2_spec,
            const_spec(w1a),
            const_spec(w1b),
            const_spec(b1),
            const_spec(w2),
            const_spec(b2),
            const_spec(w3),
            const_spec(b3t),
        ],
        out_specs=out_spec,
        compiler_params=pltpu.CompilerParams(
            dimension_semantics=("parallel",)),
        cost_estimate=cost,
    )(x1c, x2c, w1a, w1b, b1, w2, b2, w3, b3t)

    # Transposed, lane-dense kernel output -> (B, out_dim).
    return out_t.T[:batch]


def init_params(key, input1_dim, input2_dim, output_dim):
    """Deterministic synthetic parameters (PyTorch-Linear-like uniform init).

    Weights stored transposed relative to PyTorch: (in_features, out_features).
    """
    in_dim = input1_dim + input2_dim
    ks = jax.random.split(key, 6)

    def uni(k, shape, fan_in):
        bound = 1.0 / jnp.sqrt(fan_in)
        return jax.random.uniform(k, shape, jnp.float32, -bound, bound)

    return {
        "w1": uni(ks[0], (in_dim, HIDDEN), in_dim),
        "b1": uni(ks[1], (1, HIDDEN), in_dim),
        "w2": uni(ks[2], (HIDDEN, HIDDEN), HIDDEN),
        "b2": uni(ks[3], (1, HIDDEN), HIDDEN),
        "w3": uni(ks[4], (HIDDEN, output_dim), HIDDEN),
        "b3": uni(ks[5], (1, output_dim), HIDDEN),
    }


def reference_forward(x1, x2, params):
    x = jnp.concatenate([x1, x2], axis=1)
    h1 = jnp.maximum(x @ params["w1"] + params["b1"], 0.0)
    h2 = jnp.maximum(h1 @ params["w2"] + params["b2"], 0.0)
    return h2 @ params["w3"] + params["b3"]


if __name__ == "__main__":
    # Small, forward-consistent shapes: state dim 8, action dim 4, Q-output 1.
    batch, input1_dim, input2_dim, output_dim = 8, 8, 4, 1

    key = jax.random.PRNGKey(0)
    k_x1, k_x2, k_p = jax.random.split(key, 3)

    x1 = jax.random.normal(k_x1, (batch, input1_dim), jnp.float32)
    x2 = jax.random.normal(k_x2, (batch, input2_dim), jnp.float32)
    params = init_params(k_p, input1_dim, input2_dim, output_dim)

    out = jax.block_until_ready(value_net_forward(x1, x2, params))
    ref = reference_forward(x1, x2, params)
    assert out.shape == (batch, output_dim)
    assert jnp.allclose(out, ref, atol=1e-5, rtol=1e-5)

    # Exercise a multi-step grid + batch padding (tile forced to 128).
    big_b = 300
    kb1, kb2 = jax.random.split(jax.random.PRNGKey(1))
    bx1 = jax.random.normal(kb1, (big_b, input1_dim), jnp.float32)
    bx2 = jax.random.normal(kb2, (big_b, input2_dim), jnp.float32)
    big_out = jax.block_until_ready(
        value_net_forward(bx1, bx2, params, block_m=128))
    big_ref = reference_forward(bx1, bx2, params)
    assert big_out.shape == (big_b, output_dim)
    assert jnp.allclose(big_out, big_ref, atol=1e-5, rtol=1e-5)

    print("KERNEL_OK")
</pallas_src>

<mosaic_0001>
module attributes {stable_mosaic.version = 11 : i64} {
  func.func @_value_net_kernel(%arg0: i32, %arg1: memref<8x8xf32, #tpu.memory_space<vmem>>, %arg2: memref<8x4xf32, #tpu.memory_space<vmem>>, %arg3: memref<8x128xf32, #tpu.memory_space<vmem>>, %arg4: memref<4x128xf32, #tpu.memory_space<vmem>>, %arg5: memref<1x128xf32, #tpu.memory_space<vmem>>, %arg6: memref<128x128xf32, #tpu.memory_space<vmem>>, %arg7: memref<1x128xf32, #tpu.memory_space<vmem>>, %arg8: memref<128x1xf32, #tpu.memory_space<vmem>>, %arg9: memref<1x1xf32, #tpu.memory_space<vmem>>, %arg10: memref<1x8xf32, #tpu.memory_space<vmem>>) attributes {dimension_semantics = [#tpu.dimension_semantics<parallel>], iteration_bounds = array<i64: 1>, scalar_prefetch = 0 : i64, scratch_operands = 0 : i64, tpu.core_type = #tpu.core_type<tc>, window_params = [{transform_indices = @transform_0, window_bounds = array<i64: 8, 8>}, {transform_indices = @transform_1, window_bounds = array<i64: 8, 4>}, {pipeline_mode = #tpu.pipeline_mode<synchronous>, transform_indices = @transform_2, window_bounds = array<i64: 8, 128>}, {pipeline_mode = #tpu.pipeline_mode<synchronous>, transform_indices = @transform_3, window_bounds = array<i64: 4, 128>}, {pipeline_mode = #tpu.pipeline_mode<synchronous>, transform_indices = @transform_4, window_bounds = array<i64: 1, 128>}, {pipeline_mode = #tpu.pipeline_mode<synchronous>, transform_indices = @transform_5, window_bounds = array<i64: 128, 128>}, {pipeline_mode = #tpu.pipeline_mode<synchronous>, transform_indices = @transform_6, window_bounds = array<i64: 1, 128>}, {pipeline_mode = #tpu.pipeline_mode<synchronous>, transform_indices = @transform_7, window_bounds = array<i64: 128, 1>}, {pipeline_mode = #tpu.pipeline_mode<synchronous>, transform_indices = @transform_8, window_bounds = array<i64: 1, 1>}, {transform_indices = @transform_9, window_bounds = array<i64: 1, 8>}]} {
    %c0 = arith.constant 0 : index
    %c0_0 = arith.constant 0 : index
    %0 = vector.load %arg1[%c0, %c0_0] : memref<8x8xf32, #tpu.memory_space<vmem>>, vector<8x8xf32>
    %c0_1 = arith.constant 0 : index
    %c0_2 = arith.constant 0 : index
    %1 = vector.load %arg3[%c0_1, %c0_2] : memref<8x128xf32, #tpu.memory_space<vmem>>, vector<8x128xf32>
    %cst = arith.constant dense<0.000000e+00> : vector<8x128xf32>
    %2 = tpu.matmul %0, %1, %cst {dimension_numbers = #tpu.dot_dimension_numbers<[1], [0], [0], [1], [0, 0, 1, 1], [], []>} : vector<8x8xf32>, vector<8x128xf32>, vector<8x128xf32> -> vector<8x128xf32>
    %c0_3 = arith.constant 0 : index
    %c0_4 = arith.constant 0 : index
    %3 = vector.load %arg2[%c0_3, %c0_4] : memref<8x4xf32, #tpu.memory_space<vmem>>, vector<8x4xf32>
    %c0_5 = arith.constant 0 : index
    %c0_6 = arith.constant 0 : index
    %4 = vector.load %arg4[%c0_5, %c0_6] : memref<4x128xf32, #tpu.memory_space<vmem>>, vector<4x128xf32>
    %cst_7 = arith.constant dense<0.000000e+00> : vector<8x128xf32>
    %5 = tpu.matmul %3, %4, %cst_7 {dimension_numbers = #tpu.dot_dimension_numbers<[1], [0], [0], [1], [0, 0, 1, 1], [], []>} : vector<8x4xf32>, vector<4x128xf32>, vector<8x128xf32> -> vector<8x128xf32>
    %6 = arith.addf %2, %5 : vector<8x128xf32>
    %c0_8 = arith.constant 0 : index
    %c0_9 = arith.constant 0 : index
    %7 = vector.load %arg5[%c0_8, %c0_9] : memref<1x128xf32, #tpu.memory_space<vmem>>, vector<1x128xf32>
    %8 = vector.broadcast %7 : vector<1x128xf32> to vector<8x128xf32>
    %9 = arith.addf %6, %8 : vector<8x128xf32>
    %cst_10 = arith.constant 0.000000e+00 : f32
    %10 = vector.broadcast %cst_10 : f32 to vector<8x128xf32>
    %11 = arith.maximumf %9, %10 : vector<8x128xf32>
    %c0_11 = arith.constant 0 : index
    %c0_12 = arith.constant 0 : index
    %12 = vector.load %arg6[%c0_11, %c0_12] : memref<128x128xf32, #tpu.memory_space<vmem>>, vector<128x128xf32>
    %cst_13 = arith.constant dense<0.000000e+00> : vector<8x128xf32>
    %13 = tpu.matmul %11, %12, %cst_13 {dimension_numbers = #tpu.dot_dimension_numbers<[1], [0], [0], [1], [0, 0, 1, 1], [], []>} : vector<8x128xf32>, vector<128x128xf32>, vector<8x128xf32> -> vector<8x128xf32>
    %c0_14 = arith.constant 0 : index
    %c0_15 = arith.constant 0 : index
    %14 = vector.load %arg7[%c0_14, %c0_15] : memref<1x128xf32, #tpu.memory_space<vmem>>, vector<1x128xf32>
    %15 = vector.broadcast %14 : vector<1x128xf32> to vector<8x128xf32>
    %16 = arith.addf %13, %15 : vector<8x128xf32>
    %cst_16 = arith.constant 0.000000e+00 : f32
    %17 = vector.broadcast %cst_16 : f32 to vector<8x128xf32>
    %18 = arith.maximumf %16, %17 : vector<8x128xf32>
    %c0_17 = arith.constant 0 : index
    %c0_18 = arith.constant 0 : index
    %19 = vector.load %arg8[%c0_17, %c0_18] : memref<128x1xf32, #tpu.memory_space<vmem>>, vector<128x1xf32>
    %cst_19 = arith.constant dense<0.000000e+00> : vector<1x8xf32>
    %20 = tpu.matmul %19, %18, %cst_19 {dimension_numbers = #tpu.dot_dimension_numbers<[0], [1], [1], [0], [0, 1, 1, 0], [], []>} : vector<128x1xf32>, vector<8x128xf32>, vector<1x8xf32> -> vector<1x8xf32>
    %c0_20 = arith.constant 0 : index
    %c0_21 = arith.constant 0 : index
    %21 = vector.load %arg9[%c0_20, %c0_21] : memref<1x1xf32, #tpu.memory_space<vmem>>, vector<1x1xf32>
    %22 = vector.broadcast %21 : vector<1x1xf32> to vector<1x8xf32>
    %23 = arith.addf %20, %22 : vector<1x8xf32>
    %c0_22 = arith.constant 0 : index
    %c0_23 = arith.constant 0 : index
    %24 = vector.load %arg10[%c0_22, %c0_23] : memref<1x8xf32, #tpu.memory_space<vmem>>, vector<1x8xf32>
    tpu.vector_store %arg10[%c0_22, %c0_23], %23 {strides = array<i32>} : memref<1x8xf32, #tpu.memory_space<vmem>>, vector<1x8xf32>,
    return
  }
  func.func @transform_0(%arg0: i32) -> (i32, i32) {
    %c0_i32 = arith.constant 0 : i32
    %c0_i32_0 = arith.constant 0 : i32
    return %arg0, %c0_i32 : i32, i32
  }
  func.func @transform_1(%arg0: i32) -> (i32, i32) {
    %c0_i32 = arith.constant 0 : i32
    %c0_i32_0 = arith.constant 0 : i32
    return %arg0, %c0_i32 : i32, i32
  }
  func.func @transform_2(%arg0: i32) -> (i32, i32) {
    %c0_i32 = arith.constant 0 : i32
    %c0_i32_0 = arith.constant 0 : i32
    %c0_i32_1 = arith.constant 0 : i32
    return %c0_i32, %c0_i32_0 : i32, i32
  }
  func.func @transform_3(%arg0: i32) -> (i32, i32) {
    %c0_i32 = arith.constant 0 : i32
    %c0_i32_0 = arith.constant 0 : i32
    %c0_i32_1 = arith.constant 0 : i32
    return %c0_i32, %c0_i32_0 : i32, i32
  }
  func.func @transform_4(%arg0: i32) -> (i32, i32) {
    %c0_i32 = arith.constant 0 : i32
    %c0_i32_0 = arith.constant 0 : i32
    %c0_i32_1 = arith.constant 0 : i32
    return %c0_i32, %c0_i32_0 : i32, i32
  }
  func.func @transform_5(%arg0: i32) -> (i32, i32) {
    %c0_i32 = arith.constant 0 : i32
    %c0_i32_0 = arith.constant 0 : i32
    %c0_i32_1 = arith.constant 0 : i32
    return %c0_i32, %c0_i32_0 : i32, i32
  }
  func.func @transform_6(%arg0: i32) -> (i32, i32) {
    %c0_i32 = arith.constant 0 : i32
    %c0_i32_0 = arith.constant 0 : i32
    %c0_i32_1 = arith.constant 0 : i32
    return %c0_i32, %c0_i32_0 : i32, i32
  }
  func.func @transform_7(%arg0: i32) -> (i32, i32) {
    %c0_i32 = arith.constant 0 : i32
    %c0_i32_0 = arith.constant 0 : i32
    %c0_i32_1 = arith.constant 0 : i32
    return %c0_i32, %c0_i32_0 : i32, i32
  }
  func.func @transform_8(%arg0: i32) -> (i32, i32) {
    %c0_i32 = arith.constant 0 : i32
    %c0_i32_0 = arith.constant 0 : i32
    %c0_i32_1 = arith.constant 0 : i32
    return %c0_i32, %c0_i32_0 : i32, i32
  }
  func.func @transform_9(%arg0: i32) -> (i32, i32) {
    %c0_i32 = arith.constant 0 : i32
    %c0_i32_0 = arith.constant 0 : i32
    return %c0_i32, %arg0 : i32, i32
  }
}

</mosaic_0001>

<llo_original>
// kernel: tpu_custom_call.1
$region0: #{tpu_custom_call.1}
  #allocation0 [shape = 'u32[]', space=smem, size = 0x4, offset = 0x4, fixed_abs, tag = 'smem constant byte address 0x4 - core index']
  #allocation1 [shape = 'u32[72,128]{1,0:T(1,128)}', space=vmem, size = 0x9000, scoped, tag = 'internal scratch']
  #allocation2 [shape = 'f32[1,1]{1,0:T(1,128)S(1)}', space=vmem, size = 0x200, scoped, tag = 'scoped memory for tpu_custom_call.1']
  %s0 = inlined_call_operand.vmem [shape: f32[8,8], index: 0, kind: input, shape index: {}]
  %s1 = inlined_call_operand.vmem [shape: f32[8,4], index: 1, kind: input, shape index: {}]
  %s2 = inlined_call_operand.vmem [shape: f32[8,128], index: 2, kind: input, shape index: {}]
  %s3 = inlined_call_operand.hbm [shape: f32[4,128], index: 3, kind: input, shape index: {}]
  %s4 = inlined_call_operand.vmem [shape: f32[1,128], index: 4, kind: input, shape index: {}]
  %s5 = inlined_call_operand.vmem [shape: f32[128,128], index: 5, kind: input, shape index: {}]
  %s6 = inlined_call_operand.vmem [shape: f32[1,128], index: 6, kind: input, shape index: {}]
  %s7 = inlined_call_operand.vmem [shape: f32[128,1], index: 7, kind: input, shape index: {}]
  %s8 = inlined_call_operand.<no memory space> [shape: f32[1,1], index: 8, kind: input, shape index: {}]
  %s9 = inlined_call_operand.hbm [shape: f32[1,8], index: 9, kind: output, shape index: {}]
  %s10 = sld [smem:[#allocation0]]
  $region50: #{tpu_custom_call.1} parent=0
    _
  %s12 = ssub.s32 1, %s10
  %s13 = scalar_select 0, %s12, %s10
  %v14 = vstv %s8
  %15 = vst [vmem:[#allocation2] sm:$0x1] %v14
  $region1: #{tpu_custom_call.1} parent=0
    #allocation3 [shape = 'u8[2048]{0}', space=vmem, size = 0x800, scoped, tag = 'input window, operand 3, single buffered']
    #allocation4 [shape = 's32[1]{0}', space=sflag, size = 0x4, scoped, tag = 'scoped memory for tpu_custom_call.1']
    #allocation5 [shape = 's32[1]{0}', space=sflag, size = 0x4, scoped, tag = 'scoped memory for tpu_custom_call.1']
    #allocation6 [shape = 'u8[512]{0}', space=vmem, size = 0x400, scoped, tag = 'output window, operand 0, single buffered']
    %16 = vsyncpa [#allocation4], 0
    %17 = vsyncpa [#allocation5], 0
    // Predicated region
    $region2: #{tpu_custom_call.1} parent=1 // pred_check
      _
    $region3: #{tpu_custom_call.1} parent=1 // pred_check_branch
      %19 = sbr.rel (0) target = $region5
    $region4: #{tpu_custom_call.1} parent=1 // pred_region
      _
    $region5: #{tpu_custom_call.1} parent=1 // pred_fallthru
      _
    // Predicated region
    $region6: #{tpu_custom_call.1} parent=1 // pred_check
      _
    $region7: #{tpu_custom_call.1} parent=1 // pred_check_branch
      %21 = sbr.rel (0) target = $region9
    $region8: #{tpu_custom_call.1} parent=1 // pred_region
      _
    $region9: #{tpu_custom_call.1} parent=1 // pred_fallthru
      _
    // Predicated region
    $region10: #{tpu_custom_call.1} parent=1 // pred_check
      _
    $region11: #{tpu_custom_call.1} parent=1 // pred_check_branch
      %23 = sbr.rel (0) target = $region13
    $region12: #{tpu_custom_call.1} parent=1 // pred_region
      _
    $region13: #{tpu_custom_call.1} parent=1 // pred_fallthru
      _
    // Predicated region
    $region14: #{tpu_custom_call.1} parent=1 // pred_check
      _
    $region15: #{tpu_custom_call.1} parent=1 // pred_check_branch
      %25 = sbr.rel (0) target = $region17
    $region16: #{tpu_custom_call.1} parent=1 // pred_region
      %27 = vsyncadd [#allocation4], 0
      %s29 = sshll.u32 %s3, 4
      %s30 = int_to_ptr.hbm [resolvable:$true] %s29
      %s31 = sshll.u32 [#allocation3], 4
      %s32 = int_to_ptr.vmem [resolvable:$true] %s31
      %34 = dma.hbm_to_vmem [thread:$0]  %s30, 64, %s32, [#allocation4]
    $region17: #{tpu_custom_call.1} parent=1 // pred_fallthru
      _
    // Predicated region
    $region18: #{tpu_custom_call.1} parent=1 // pred_check
      _
    $region19: #{tpu_custom_call.1} parent=1 // pred_check_branch
      %36 = sbr.rel (0) target = $region21
    $region20: #{tpu_custom_call.1} parent=1 // pred_region
      _
    $region21: #{tpu_custom_call.1} parent=1 // pred_fallthru
      _
    // Predicated region
    $region22: #{tpu_custom_call.1} parent=1 // pred_check
      _
    $region23: #{tpu_custom_call.1} parent=1 // pred_check_branch
      %38 = sbr.rel (0) target = $region25
    $region24: #{tpu_custom_call.1} parent=1 // pred_region
      _
    $region25: #{tpu_custom_call.1} parent=1 // pred_fallthru
      _
    // Predicated region
    $region26: #{tpu_custom_call.1} parent=1 // pred_check
      _
    $region27: #{tpu_custom_call.1} parent=1 // pred_check_branch
      %40 = sbr.rel (0) target = $region29
    $region28: #{tpu_custom_call.1} parent=1 // pred_region
      _
    $region29: #{tpu_custom_call.1} parent=1 // pred_fallthru
      _
    // Predicated region
    $region30: #{tpu_custom_call.1} parent=1 // pred_check
      _
    $region31: #{tpu_custom_call.1} parent=1 // pred_check_branch
      %42 = sbr.rel (0) target = $region33
    $region32: #{tpu_custom_call.1} parent=1 // pred_region
      _
    $region33: #{tpu_custom_call.1} parent=1 // pred_fallthru
      _
    // Predicated region
    $region34: #{tpu_custom_call.1} parent=1 // pred_check
      _
    $region35: #{tpu_custom_call.1} parent=1 // pred_check_branch
      %44 = sbr.rel (0) target = $region37
    $region36: #{tpu_custom_call.1} parent=1 // pred_region
      _
    $region37: #{tpu_custom_call.1} parent=1 // pred_fallthru
      _
    // Predicated region
    $region38: #{tpu_custom_call.1} parent=1 // pred_check
      _
    $region39: #{tpu_custom_call.1} parent=1 // pred_check_branch
      %46 = sbr.rel (0) target = $region41
    $region40: #{tpu_custom_call.1} parent=1 // pred_region
      %48 = dma.done [#allocation4], 64
    $region41: #{tpu_custom_call.1} parent=1 // pred_fallthru
      _
    %v49 = vld [vmem:[%s0] sm:$0xff]
    %v50 = vld [vmem:[%s2] sm:$0xff]
    %v51 = vld [vmem:[%s1] sm:$0xff]
    %v52 = vld [vmem:[#allocation3] sm:$0xf]
    %vm53 = vcmask 31744
    %v55 = vsel %vm53, %v51, 0
    %vm57 = vcmask 1043456
    %v59 = vsel %vm57, %v52, 0
    %61 = vmatpush.msra.mxu0 0.0
    %62 = vmatpush.msra.mxu0 0.0
    %63 = vmatpush.msra.mxu0 0.0
    %64 = vmatpush.msra.mxu0 0.0
    %65 = vmatpush.msra.mxu0 0.0
    %66 = vmatpush.msra.mxu0 0.0
    %67 = vmatpush.msra.mxu0 0.0
    %68 = vmatpush.msra.mxu0 0.0
    %69 = vmatpush.msra.mxu0 0.0
    %70 = vmatpush.msra.mxu0 0.0
    %71 = vmatpush.msra.mxu0 0.0
    %72 = vmatpush.msra.mxu0 0.0
    %73 = vmatpush.msra.mxu0 0.0
    %74 = vmatpush.msra.mxu0 0.0
    %75 = vmatpush.msra.mxu0 0.0
    %76 = vmatpush.msra.mxu0 %v59
    %77 = vmatmul.f32.gmra.mxu0 %v55
    %v78 = vpop.f32.mrf.mxu0
    %v79 = vadd.f32 0.0, %v78
    %80 = vdwg.mxu0
    %vm81 = vcmask 64512
    %v83 = vsel %vm81, %v49, 0
    %85 = vmatpush.msra.mxu0 0.0
    %86 = vmatpush.msra.mxu0 0.0
    %87 = vmatpush.msra.mxu0 0.0
    %88 = vmatpush.msra.mxu0 0.0
    %89 = vmatpush.msra.mxu0 0.0
    %90 = vmatpush.msra.mxu0 0.0
    %91 = vmatpush.msra.mxu0 0.0
    %92 = vmatpush.msra.mxu0 0.0
    %93 = vmatpush.msra.mxu0 0.0
    %94 = vmatpush.msra.mxu0 0.0
    %95 = vmatpush.msra.mxu0 0.0
    %96 = vmatpush.msra.mxu0 0.0
    %97 = vmatpush.msra.mxu0 0.0
    %98 = vmatpush.msra.mxu0 0.0
    %99 = vmatpush.msra.mxu0 0.0
    %100 = vmatpush.msra.mxu0 %v50
    %101 = vmatmul.f32.gmra.mxu0 %v83
    %v102 = vpop.f32.mrf.mxu0
    %v103 = vadd.f32 %v79, %v102
    %104 = vdwg.mxu0
    %v105 = vld [vmem:[%s4] sm:$0x1]
    %v107 = vperm.slane %v105, 0
    %v109 = vadd.f32 %v103, %v107
    %v110 = vmax.f32 %v109, 0.0
    %v111 = vld [vmem:[%s5] sm:$0xff]
    %v112 = vld [vmem:[%s5 + $0x8] sm:$0xff]
    %v113 = vld [vmem:[%s5 + $0x10] sm:$0xff]
    %v114 = vld [vmem:[%s5 + $0x18] sm:$0xff]
    %v115 = vld [vmem:[%s5 + $0x20] sm:$0xff]
    %v116 = vld [vmem:[%s5 + $0x28] sm:$0xff]
    %v117 = vld [vmem:[%s5 + $0x30] sm:$0xff]
    %v118 = vld [vmem:[%s5 + $0x38] sm:$0xff]
    %v119 = vld [vmem:[%s5 + $0x40] sm:$0xff]
    %v120 = vld [vmem:[%s5 + $0x48] sm:$0xff]
    %v121 = vld [vmem:[%s5 + $0x50] sm:$0xff]
    %v122 = vld [vmem:[%s5 + $0x58] sm:$0xff]
    %v123 = vld [vmem:[%s5 + $0x60] sm:$0xff]
    %v124 = vld [vmem:[%s5 + $0x68] sm:$0xff]
    %v125 = vld [vmem:[%s5 + $0x70] sm:$0xff]
    %v126 = vld [vmem:[%s5 + $0x78] sm:$0xff]
    %v127 = vld [vmem:[%s6] sm:$0x1]
    %v129 = vperm.slane %v127, 0
    %131 = vmatpush.msra.mxu0 %v126
    %132 = vmatpush.msra.mxu0 %v125
    %133 = vmatpush.msra.mxu0 %v124
    %134 = vmatpush.msra.mxu0 %v123
    %135 = vmatpush.msra.mxu0 %v122
    %136 = vmatpush.msra.mxu0 %v121
    %137 = vmatpush.msra.mxu0 %v120
    %138 = vmatpush.msra.mxu0 %v119
    %139 = vmatpush.msra.mxu0 %v118
    %140 = vmatpush.msra.mxu0 %v117
    %141 = vmatpush.msra.mxu0 %v116
    %142 = vmatpush.msra.mxu0 %v115
    %143 = vmatpush.msra.mxu0 %v114
    %144 = vmatpush.msra.mxu0 %v113
    %145 = vmatpush.msra.mxu0 %v112
    %146 = vmatpush.msra.mxu0 %v111
    %147 = vmatmul.f32.gmra.mxu0 %v110
    %v148 = vpop.f32.mrf.mxu0
    %v149 = vadd.f32 %v129, %v148
    %150 = vdwg.mxu0
    %v151 = vmax.f32 %v149, 0.0
    %v152 = vld [vmem:[%s7] sm:$0xff]
    %v153 = vld [vmem:[%s7 + $0x8] sm:$0xff]
    %v154 = vld [vmem:[%s7 + $0x10] sm:$0xff]
    %v155 = vld [vmem:[%s7 + $0x18] sm:$0xff]
    %v156 = vld [vmem:[%s7 + $0x20] sm:$0xff]
    %v157 = vld [vmem:[%s7 + $0x28] sm:$0xff]
    %v158 = vld [vmem:[%s7 + $0x30] sm:$0xff]
    %v159 = vld [vmem:[%s7 + $0x38] sm:$0xff]
    %v160 = vld [vmem:[%s7 + $0x40] sm:$0xff]
    %v161 = vld [vmem:[%s7 + $0x48] sm:$0xff]
    %v162 = vld [vmem:[%s7 + $0x50] sm:$0xff]
    %v163 = vld [vmem:[%s7 + $0x58] sm:$0xff]
    %v164 = vld [vmem:[%s7 + $0x60] sm:$0xff]
    %v165 = vld [vmem:[%s7 + $0x68] sm:$0xff]
    %v166 = vld [vmem:[%s7 + $0x70] sm:$0xff]
    %v167 = vld [vmem:[%s7 + $0x78] sm:$0xff]
    %v168 = vld [vmem:[#allocation2] sm:$0x1]
    %170 = vset.pattern.permute.xlu0 0
    %171 = vperm.xlu0 %170, %v168
    %v172 = vpop.permute.xlu0 %171
    %v174 = vperm.slane %v172, 0
    %175 = vxpose.xlu0.b32.start [1/16] %v152, 128
    %176 = vxpose.xlu0.b32.cont [2/16] %v153, 128
    %177 = vxpose.xlu0.b32.cont [3/16] %v154, 128
    %178 = vxpose.xlu0.b32.cont [4/16] %v155, 128
    %179 = vxpose.xlu0.b32.cont [5/16] %v156, 128
    %180 = vxpose.xlu0.b32.cont [6/16] %v157, 128
    %181 = vxpose.xlu0.b32.cont [7/16] %v158, 128
    %182 = vxpose.xlu0.b32.cont [8/16] %v159, 128
    %183 = vxpose.xlu0.b32.cont [9/16] %v160, 128
    %184 = vxpose.xlu0.b32.cont [10/16] %v161, 128
    %185 = vxpose.xlu0.b32.cont [11/16] %v162, 128
    %186 = vxpose.xlu0.b32.cont [12/16] %v163, 128
    %187 = vxpose.xlu0.b32.cont [13/16] %v164, 128
    %188 = vxpose.xlu0.b32.cont [14/16] %v165, 128
    %189 = vxpose.xlu0.b32.cont [15/16] %v166, 128
    %190 = vxpose.xlu0.b32.end [16/16] %v167, 128
    %v191 = vpop.trf.xlu0
    %v192 = vpop.trf.xlu0
    %v193 = vpop.trf.xlu0
    %v194 = vpop.trf.xlu0
    %v195 = vpop.trf.xlu0
    %v196 = vpop.trf.xlu0
    %v197 = vpop.trf.xlu0
    %v198 = vpop.trf.xlu0
    %v199 = vpop.trf.xlu0
    %v200 = vpop.trf.xlu0
    %v201 = vpop.trf.xlu0
    %v202 = vpop.trf.xlu0
    %v203 = vpop.trf.xlu0
    %v204 = vpop.trf.xlu0
    %v205 = vpop.trf.xlu0
    %v206 = vpop.trf.xlu0
    %207 = vmatpush.xpose.msra.mxu0 0.0
    %208 = vmatpush.xpose.msra.mxu0 0.0
    %209 = vmatpush.xpose.msra.mxu0 0.0
    %210 = vmatpush.xpose.msra.mxu0 0.0
    %211 = vmatpush.xpose.msra.mxu0 0.0
    %212 = vmatpush.xpose.msra.mxu0 0.0
    %213 = vmatpush.xpose.msra.mxu0 0.0
    %214 = vmatpush.xpose.msra.mxu0 0.0
    %215 = vmatpush.xpose.msra.mxu0 0.0
    %216 = vmatpush.xpose.msra.mxu0 0.0
    %217 = vmatpush.xpose.msra.mxu0 0.0
    %218 = vmatpush.xpose.msra.mxu0 0.0
    %219 = vmatpush.xpose.msra.mxu0 0.0
    %220 = vmatpush.xpose.msra.mxu0 0.0
    %221 = vmatpush.xpose.msra.mxu0 0.0
    %222 = vmatpush.xpose.msra.mxu0 %v151
    %223 = vmatmul.f32.gmra.mxu0 %v191
    %v224 = vpop.f32.mrf.mxu0
    %v225 = vadd.f32 %v174, %v224
    %226 = vdwg.mxu0
    %vm227 = vcmask 57344
    %228 = vst.msk [vmem:[#allocation6] sm:$0x1] %vm227, %v225
    // Predicated region
    $region42: #{tpu_custom_call.1} parent=1 // pred_check
      _
    $region43: #{tpu_custom_call.1} parent=1 // pred_check_branch
      %230 = sbr.rel (0) target = $region45
    $region44: #{tpu_custom_call.1} parent=1 // pred_region
      %232 = vsyncadd [#allocation5], 0
      %s234 = sshll.u32 [#allocation6], 4
      %s235 = int_to_ptr.vmem [resolvable:$true] %s234
      %s236 = sshll.u32 %s9, 4
      %s237 = int_to_ptr.hbm [resolvable:$true] %s236
      %239 = dma.vmem_to_hbm [thread:$0]  %s235, 16, %s237, [#allocation5]
    $region45: #{tpu_custom_call.1} parent=1 // pred_fallthru
      _
    // Predicated region
    $region46: #{tpu_custom_call.1} parent=1 // pred_check
      _
    $region47: #{tpu_custom_call.1} parent=1 // pred_check_branch
      %241 = sbr.rel (0) target = $region49
    $region48: #{tpu_custom_call.1} parent=1 // pred_region
      %243 = dma.done [#allocation5], 16
    $region49: #{tpu_custom_call.1} parent=1 // pred_fallthru
      _
    %244 = vsyncpa [#allocation4], 1
    %245 = vsyncpa [#allocation5], 1

</llo_original>
